<compile_context>
chip_gen: v6e
topology: v6e:2x2x1
jax: 0.10.0
libtpu: 0.0.40
codegen_flags: <defaults>
</compile_context>

<pallas_src>
import functools
import numpy as np
import jax
import jax.numpy as jnp
from jax.experimental import pallas as pl
from jax.experimental.pallas import tpu as pltpu

TCO = 128          # output-channel tile (lane aligned)
TM_MAX = 256       # max rows per M tile
EPS = 1e-5


def _round_up(x, m):
    return (x + m - 1) // m * m


def _pick_vmem_limit():
    """Generation-aware VMEM limit: leave headroom on v7x (64 MiB physical)."""
    try:
        info = pltpu.get_tpu_info()
        cap = int(getattr(info, "vmem_capacity_bytes"))
        return int(min(cap - (16 << 20), 100 << 20))
    except Exception:
        return 48 * 1024 * 1024   # safe on every generation incl. v7x


_VMEM_LIMIT = _pick_vmem_limit()


# ----------------------------------------------------------------------------
# Pallas kernels
# ----------------------------------------------------------------------------
def _make_conv_kernel(relu, has_res, has_post):
    """Fused conv tile:  y = acc*scale + shift (+res) (+relu) (+post-BN+relu)."""
    def kernel(*refs):
        p_ref, w_ref, s_ref, b_ref = refs[:4]
        idx = 4
        if has_res:
            r_ref = refs[idx]; idx += 1
        if has_post:
            ps_ref, pt_ref = refs[idx], refs[idx + 1]; idx += 2
        o_ref = refs[idx]

        # single deep-contraction bf16 matmul on the MXU, f32 accumulation
        acc = jnp.dot(p_ref[...], w_ref[...],
                      preferred_element_type=jnp.float32)
        y = acc * s_ref[...] + b_ref[...]           # folded BatchNorm / bias (f32)
        if has_res:
            y = y + r_ref[...]                      # fused residual add
        if relu:
            y = jnp.maximum(y, 0.0)
        if has_post:                                # trailing BN + ReLU, fused
            y = jnp.maximum(y * ps_ref[...] + pt_ref[...], 0.0)
        o_ref[...] = y
    return kernel


def _max4_kernel(a_ref, b_ref, c_ref, d_ref, o_ref):
    o_ref[...] = jnp.maximum(jnp.maximum(a_ref[...], b_ref[...]),
                             jnp.maximum(c_ref[...], d_ref[...]))


# ----------------------------------------------------------------------------
# Conv wrapper: im2col + tiled, pipelined pallas_call
# ----------------------------------------------------------------------------
def _im2col(x, k):
    """x: (N,H,W,C) -> (N*H*W, K*K*C) with 'same' zero padding."""
    n, h, w, c = x.shape
    pad = k // 2
    xp = jnp.pad(x, ((0, 0), (pad, pad), (pad, pad), (0, 0)))
    cols = []
    for dy in range(k):
        for dx in range(k):
            cols.append(xp[:, dy:dy + h, dx:dx + w, :])
    # TODO(synk): this still replicates the input K*K times through HBM; an
    # in-kernel shifted-window gather (manual DMA from a single padded slab)
    # would cut conv input traffic by ~K^2.
    return jnp.concatenate(cols, axis=-1).reshape(n * h * w, k * k * c)


@functools.partial(jax.jit, static_argnames=("k", "relu"))
def conv_apply(x, w, scale, shift, *, k, relu,
               residual=None, pre_scale=None, pre_shift=None,
               post_scale=None, post_shift=None):
    """Conv2d(k, padding='same') + per-channel affine (+res) (+ReLU) (+post-BN+ReLU).

    x: (N,H,W,Cin) f32.  w: (K*K*Cin, Cout) bf16.  scale/shift: (Cout,) f32.
    pre_scale/pre_shift: exact leading BN applied to x *before* zero padding.
    """
    n, h, ww, cin = x.shape
    kkc, cout = w.shape
    assert kkc == k * k * cin
    m = n * h * ww

    cout_p = _round_up(cout, TCO)
    kkc_p = _round_up(kkc, 128)
    tm = min(TM_MAX, _round_up(m, 8))
    m_pad = _round_up(m, tm)

    if pre_scale is not None:
        x = x * pre_scale + pre_shift          # f32 affine, before padding (exact)

    # bf16 operands for the MXU; epilogue stays in f32.
    patches = _im2col(x.astype(jnp.bfloat16), k)
    patches = jnp.pad(patches, ((0, m_pad - m), (0, kkc_p - kkc)))
    wp = jnp.pad(w.astype(jnp.bfloat16), ((0, kkc_p - kkc), (0, cout_p - cout)))
    sp = jnp.pad(scale.astype(jnp.float32).reshape(1, -1),
                 ((0, 0), (0, cout_p - cout)))
    bp = jnp.pad(shift.astype(jnp.float32).reshape(1, -1),
                 ((0, 0), (0, cout_p - cout)))

    inputs = [patches, wp, sp, bp]
    in_specs = [
        pl.BlockSpec((tm, kkc_p), lambda j, i: (i, 0)),    # patches: stream over M
        pl.BlockSpec((kkc_p, TCO), lambda j, i: (0, j)),   # weights: resident per j
        pl.BlockSpec((1, TCO), lambda j, i: (0, j)),
        pl.BlockSpec((1, TCO), lambda j, i: (0, j)),
    ]

    has_res = residual is not None
    if has_res:
        r2 = residual.astype(jnp.float32).reshape(m, cout)
        r2 = jnp.pad(r2, ((0, m_pad - m), (0, cout_p - cout)))
        inputs.append(r2)
        in_specs.append(pl.BlockSpec((tm, TCO), lambda j, i: (i, j)))

    has_post = post_scale is not None
    if has_post:
        psp = jnp.pad(post_scale.astype(jnp.float32).reshape(1, -1),
                      ((0, 0), (0, cout_p - cout)))
        ptp = jnp.pad(post_shift.astype(jnp.float32).reshape(1, -1),
                      ((0, 0), (0, cout_p - cout)))
        inputs += [psp, ptp]
        in_specs += [pl.BlockSpec((1, TCO), lambda j, i: (0, j)),
                     pl.BlockSpec((1, TCO), lambda j, i: (0, j))]

    grid = (cout_p // TCO, m_pad // tm)     # Cout outer (weights stay resident)
    y = pl.pallas_call(
        _make_conv_kernel(relu, has_res, has_post),
        out_shape=jax.ShapeDtypeStruct((m_pad, cout_p), jnp.float32),
        grid_spec=pltpu.PrefetchScalarGridSpec(
            num_scalar_prefetch=0,
            grid=grid,
            in_specs=in_specs,
            out_specs=pl.BlockSpec((tm, TCO), lambda j, i: (i, j)),
        ),
        compiler_params=pltpu.CompilerParams(
            dimension_semantics=("parallel", "parallel"),
            vmem_limit_bytes=_VMEM_LIMIT),
    )(*inputs)
    return y[:m, :cout].reshape(n, h, ww, cout)


# ----------------------------------------------------------------------------
# MaxPool2d(2,2): tiled 4-way max
# ----------------------------------------------------------------------------
@jax.jit
def maxpool2(x):
    n, h, w, c = x.shape
    a = x[:, 0::2, 0::2, :].reshape(-1, c)
    b = x[:, 0::2, 1::2, :].reshape(-1, c)
    cc = x[:, 1::2, 0::2, :].reshape(-1, c)
    d = x[:, 1::2, 1::2, :].reshape(-1, c)
    m = a.shape[0]
    tm = min(512, _round_up(m, 8))
    m_pad = _round_up(m, tm)
    pads = ((0, m_pad - m), (0, 0))
    a, b, cc, d = (jnp.pad(t, pads) for t in (a, b, cc, d))
    spec = pl.BlockSpec((tm, c), lambda i: (i, 0))
    out = pl.pallas_call(
        _max4_kernel,
        out_shape=jax.ShapeDtypeStruct((m_pad, c), jnp.float32),
        grid_spec=pltpu.PrefetchScalarGridSpec(
            num_scalar_prefetch=0,
            grid=(m_pad // tm,),
            in_specs=[spec, spec, spec, spec],
            out_specs=spec,
        ),
        compiler_params=pltpu.CompilerParams(
            dimension_semantics=("parallel",),
            vmem_limit_bytes=_VMEM_LIMIT),
    )(a, b, cc, d)
    return out[:m].reshape(n, h // 2, w // 2, c)


# ----------------------------------------------------------------------------
# JAX glue: pixel shuffle, resize
# ----------------------------------------------------------------------------
def pixel_shuffle(x, r):
    n, h, w, c = x.shape
    co = c // (r * r)
    x = x.reshape(n, h, w, co, r, r)
    x = jnp.transpose(x, (0, 1, 4, 2, 5, 3))
    return x.reshape(n, h * r, w * r, co)


def resize_to(x, hw):
    if tuple(x.shape[1:3]) == tuple(hw):
        return x
    # TODO(synk): torchvision `resize` antialias semantics not reproduced; plain bilinear.
    return jax.image.resize(x, (x.shape[0], hw[0], hw[1], x.shape[3]),
                            method="bilinear")


# ----------------------------------------------------------------------------
# Deterministic parameter initialization (synthetic; eval-mode BatchNorm)
# ----------------------------------------------------------------------------
class KeyGen:
    def __init__(self, key):
        self.key = key

    def __call__(self):
        self.key, k = jax.random.split(self.key)
        return k


def init_conv(kg, k, cin, cout):
    w = jax.random.normal(kg(), (k * k * cin, cout), jnp.float32) / np.sqrt(k * k * cin)
    b = 0.01 * jax.random.normal(kg(), (cout,), jnp.float32)
    return w.astype(jnp.bfloat16), b


def init_bn(kg, c):
    gamma = 1.0 + 0.1 * jax.random.normal(kg(), (c,), jnp.float32)
    beta = 0.1 * jax.random.normal(kg(), (c,), jnp.float32)
    mean = 0.1 * jax.random.normal(kg(), (c,), jnp.float32)
    var = 1.0 + 0.1 * jax.random.uniform(kg(), (c,), jnp.float32)
    return gamma, beta, mean, var


def fold_conv_bn(conv, bn):
    """Conv -> BN (eval): exact fold into per-output-channel scale/shift."""
    w, b = conv
    g, beta, mean, var = bn
    s = g / jnp.sqrt(var + EPS)
    t = (b - mean) * s + beta
    return w, s, t


def bn_affine(bn):
    g, beta, mean, var = bn
    s = g / jnp.sqrt(var + EPS)
    t = beta - mean * s
    return s, t


def init_down_block(kg, cin, cout):
    w1, s1, t1 = fold_conv_bn(init_conv(kg, 3, cin, cout), init_bn(kg, cout))
    w2, s2, t2 = fold_conv_bn(init_conv(kg, 3, cout, cout), init_bn(kg, cout))
    return dict(w1=w1, s1=s1, t1=t1, w2=w2, s2=s2, t2=t2)


def down_block_fwd(x, p, post=None):
    """Conv+BN+ReLU -> Conv+BN (+fused trailing BN+ReLU for e4) + residual."""
    cin = x.shape[-1]
    cout = p["s1"].shape[0]
    h = conv_apply(x, p["w1"], p["s1"], p["t1"], k=3, relu=True)
    res = x if cout == cin else jnp.concatenate([x, x], axis=-1)
    ps, pt = post if post is not None else (None, None)
    return conv_apply(h, p["w2"], p["s2"], p["t2"], k=3, relu=False,
                      residual=res, post_scale=ps, post_shift=pt)


def init_up_block(kg, cin, cout, r):
    pre_s, pre_t = bn_affine(init_bn(kg, cin))     # leading BN (applied exactly, pre-pad)
    w1, b1 = init_conv(kg, 3, cin, cout)
    w2, b2 = init_conv(kg, 3, cout, cout)
    bn_s, bn_t = bn_affine(init_bn(kg, cout))      # trailing BN, fused into conv2 epilogue
    return dict(pre_s=pre_s, pre_t=pre_t, w1=w1, b1=b1, w2=w2, b2=b2,
                bn_s=bn_s, bn_t=bn_t, r=r)


def up_block_fwd(x, p):
    cout = p["b1"].shape[0]
    ones = jnp.ones((cout,), jnp.float32)
    h = conv_apply(x, p["w1"], ones, p["b1"], k=3, relu=True,
                   pre_scale=p["pre_s"], pre_shift=p["pre_t"])
    h = conv_apply(h, p["w2"], ones, p["b2"], k=3, relu=True,
                   post_scale=p["bn_s"], post_shift=p["bn_t"])
    return pixel_shuffle(h, p["r"])


def init_runet(kg, in_ch=3, out_ch=3, r=2):
    F = [64, 128, 256, 512, 1024]
    P = {}
    P["start"] = fold_conv_bn(init_conv(kg, 7, in_ch, F[0]), init_bn(kg, F[0]))
    P["e1"] = [init_down_block(kg, F[0], F[0]) for _ in range(3)] + \
              [init_down_block(kg, F[0], F[1])]
    P["e2"] = [init_down_block(kg, F[1], F[1]) for _ in range(3)] + \
              [init_down_block(kg, F[1], F[2])]
    P["e3"] = [init_down_block(kg, F[2], F[2]) for _ in range(6)] + \
              [init_down_block(kg, F[2], F[3])]
    P["e4"] = [init_down_block(kg, F[3], F[3]) for _ in range(2)]
    P["e4_bn"] = bn_affine(init_bn(kg, F[3]))
    P["bneck1"] = init_conv(kg, 3, F[3], F[4])
    P["bneck2"] = init_conv(kg, 3, F[4], F[3])
    P["d1"] = init_up_block(kg, 512 + F[3], 512, r)
    P["d2"] = init_up_block(kg, 512 // (r * r) + F[3], 384, r)
    P["d3"] = init_up_block(kg, 384 // (r * r) + F[2], 256, r)
    P["d4"] = init_up_block(kg, 256 // (r * r) + F[1], 96, r)
    P["end1"] = init_conv(kg, 3, 96 // (r * r) + F[0], 99)
    P["end2"] = init_conv(kg, 3, 99, 99)
    P["end3"] = init_conv(kg, 1, 99, out_ch)
    return P


# ----------------------------------------------------------------------------
# RUNet forward
# ----------------------------------------------------------------------------
def runet_forward(x_nchw, P):
    x = jnp.transpose(x_nchw, (0, 2, 3, 1)).astype(jnp.float32)   # NCHW -> NHWC

    w, s, t = P["start"]
    x1 = conv_apply(x, w, s, t, k=7, relu=True)

    h = maxpool2(x1)
    for p in P["e1"]:
        h = down_block_fwd(h, p)
    x2 = h

    h = maxpool2(x2)
    for p in P["e2"]:
        h = down_block_fwd(h, p)
    x3 = h

    h = maxpool2(x3)
    for p in P["e3"]:
        h = down_block_fwd(h, p)
    x4 = h

    h = maxpool2(x4)
    for idx, p in enumerate(P["e4"]):
        post = P["e4_bn"] if idx == len(P["e4"]) - 1 else None   # fused trailing BN+ReLU
        h = down_block_fwd(h, p, post=post)
    x5 = h

    w1, b1 = P["bneck1"]
    w2, b2 = P["bneck2"]
    bn = conv_apply(x5, w1, jnp.ones((b1.shape[0],), jnp.float32), b1, k=3, relu=True)
    bn = conv_apply(bn, w2, jnp.ones((b2.shape[0],), jnp.float32), b2, k=3, relu=True)
    bn = jnp.concatenate([bn, x5], axis=-1)

    u1 = up_block_fwd(bn, P["d1"])
    u1 = resize_to(u1, x4.shape[1:3])
    u1 = jnp.concatenate([u1, x4], axis=-1)

    u2 = up_block_fwd(u1, P["d2"])
    u2 = resize_to(u2, x3.shape[1:3])
    u2 = jnp.concatenate([u2, x3], axis=-1)

    u3 = up_block_fwd(u2, P["d3"])
    u3 = resize_to(u3, x2.shape[1:3])
    u3 = jnp.concatenate([u3, x2], axis=-1)

    u4 = up_block_fwd(u3, P["d4"])
    u4 = resize_to(u4, x1.shape[1:3])
    u4 = jnp.concatenate([u4, x1], axis=-1)

    wA, bA = P["end1"]
    out = conv_apply(u4, wA, jnp.ones((bA.shape[0],), jnp.float32), bA, k=3, relu=True)
    wB, bB = P["end2"]
    out = conv_apply(out, wB, jnp.ones((bB.shape[0],), jnp.float32), bB, k=3, relu=True)
    wC, bC = P["end3"]
    out = conv_apply(out, wC, jnp.ones((bC.shape[0],), jnp.float32), bC, k=1, relu=False)

    return jnp.transpose(out, (0, 3, 1, 2))   # back to NCHW


# ----------------------------------------------------------------------------
if __name__ == "__main__":
    root = jax.random.PRNGKey(0)
    k_in, k_params = jax.random.split(root)

    # small but architecture-consistent input: N=2, C=3, 32x32
    x = jax.random.normal(k_in, (2, 3, 32, 32), jnp.float32)

    params = init_runet(KeyGen(k_params), in_ch=3, out_ch=3, r=2)

    out = runet_forward(x, params)
    out = jax.block_until_ready(out)

    assert out.shape == (2, 3, 32, 32), out.shape
    assert bool(jnp.all(jnp.isfinite(out)))
    print("KERNEL_OK")
</pallas_src>

<mosaic_0001>
module attributes {stable_mosaic.version = 11 : i64} {
  func.func @kernel(%arg0: i32, %arg1: i32, %arg2: memref<256x256xbf16, #tpu.memory_space<vmem>>, %arg3: memref<256x128xbf16, #tpu.memory_space<vmem>>, %arg4: memref<1x128xf32, #tpu.memory_space<vmem>>, %arg5: memref<1x128xf32, #tpu.memory_space<vmem>>, %arg6: memref<256x128xf32, #tpu.memory_space<vmem>>) attributes {dimension_semantics = [#tpu.dimension_semantics<parallel>, #tpu.dimension_semantics<parallel>], iteration_bounds = array<i64: 1, 8>, scalar_prefetch = 0 : i64, scratch_operands = 0 : i64, tpu.core_type = #tpu.core_type<tc>, window_params = [{transform_indices = @transform_0, window_bounds = array<i64: 256, 256>}, {transform_indices = @transform_1, window_bounds = array<i64: 256, 128>}, {transform_indices = @transform_2, window_bounds = array<i64: 1, 128>}, {transform_indices = @transform_3, window_bounds = array<i64: 1, 128>}, {transform_indices = @transform_4, window_bounds = array<i64: 256, 128>}]} {
    %c0 = arith.constant 0 : index
    %c0_0 = arith.constant 0 : index
    %0 = vector.load %arg2[%c0, %c0_0] : memref<256x256xbf16, #tpu.memory_space<vmem>>, vector<256x256xbf16>
    %c0_1 = arith.constant 0 : index
    %c0_2 = arith.constant 0 : index
    %1 = vector.load %arg3[%c0_1, %c0_2] : memref<256x128xbf16, #tpu.memory_space<vmem>>, vector<256x128xbf16>
    %cst = arith.constant dense<0.000000e+00> : vector<256x128xf32>
    %2 = tpu.matmul %0, %1, %cst {dimension_numbers = #tpu.dot_dimension_numbers<[1], [0], [0], [1], [0, 0, 1, 1], [], []>} : vector<256x256xbf16>, vector<256x128xbf16>, vector<256x128xf32> -> vector<256x128xf32>
    %c0_3 = arith.constant 0 : index
    %c0_4 = arith.constant 0 : index
    %3 = vector.load %arg4[%c0_3, %c0_4] : memref<1x128xf32, #tpu.memory_space<vmem>>, vector<1x128xf32>
    %4 = vector.broadcast %3 : vector<1x128xf32> to vector<256x128xf32>
    %5 = arith.mulf %2, %4 : vector<256x128xf32>
    %c0_5 = arith.constant 0 : index
    %c0_6 = arith.constant 0 : index
    %6 = vector.load %arg5[%c0_5, %c0_6] : memref<1x128xf32, #tpu.memory_space<vmem>>, vector<1x128xf32>
    %7 = vector.broadcast %6 : vector<1x128xf32> to vector<256x128xf32>
    %8 = arith.addf %5, %7 : vector<256x128xf32>
    %cst_7 = arith.constant 0.000000e+00 : f32
    %9 = vector.broadcast %cst_7 : f32 to vector<256x128xf32>
    %10 = arith.maximumf %8, %9 : vector<256x128xf32>
    %c0_8 = arith.constant 0 : index
    %c0_9 = arith.constant 0 : index
    %11 = vector.load %arg6[%c0_8, %c0_9] : memref<256x128xf32, #tpu.memory_space<vmem>>, vector<256x128xf32>
    tpu.vector_store %arg6[%c0_8, %c0_9], %10 {strides = array<i32>} : memref<256x128xf32, #tpu.memory_space<vmem>>, vector<256x128xf32>,
    return
  }
  func.func @transform_0(%arg0: i32, %arg1: i32) -> (i32, i32) {
    %c0_i32 = arith.constant 0 : i32
    %c0_i32_0 = arith.constant 0 : i32
    return %arg1, %c0_i32 : i32, i32
  }
  func.func @transform_1(%arg0: i32, %arg1: i32) -> (i32, i32) {
    %c0_i32 = arith.constant 0 : i32
    %c0_i32_0 = arith.constant 0 : i32
    return %c0_i32, %arg0 : i32, i32
  }
  func.func @transform_2(%arg0: i32, %arg1: i32) -> (i32, i32) {
    %c0_i32 = arith.constant 0 : i32
    %c0_i32_0 = arith.constant 0 : i32
    return %c0_i32, %arg0 : i32, i32
  }
  func.func @transform_3(%arg0: i32, %arg1: i32) -> (i32, i32) {
    %c0_i32 = arith.constant 0 : i32
    %c0_i32_0 = arith.constant 0 : i32
    return %c0_i32, %arg0 : i32, i32
  }
  func.func @transform_4(%arg0: i32, %arg1: i32) -> (i32, i32) {
    %c0_i32 = arith.constant 0 : i32
    return %arg1, %arg0 : i32, i32
  }
}

</mosaic_0001>

<llo_original>
// kernel: conv_apply.1
$region0: #{conv_apply.1}
  #allocation0 [shape = 'u32[]', space=smem, size = 0x4, offset = 0x4, fixed_abs, tag = 'smem constant byte address 0x4 - core index']
  #allocation1 [shape = 'u32[144,128]{1,0:T(1,128)}', space=vmem, size = 0x12000, scoped, tag = 'internal scratch']
  %s0 = inlined_call_operand.vmem [shape: bf16[2048,256], index: 0, kind: input, shape index: {}]
  %s1 = inlined_call_operand.vmem [shape: bf16[256,128], index: 1, kind: input, shape index: {}]
  %s2 = inlined_call_operand.vmem [shape: f32[1,128], index: 2, kind: input, shape index: {}]
  %s3 = inlined_call_operand.vmem [shape: f32[1,128], index: 3, kind: input, shape index: {}]
  %s4 = inlined_call_operand.hbm [shape: f32[2048,128], index: 4, kind: output, shape index: {}]
  %s5 = sld [smem:[#allocation0]]
  $region49: #{conv_apply.1} parent=0
    _
  %s7 = ssub.s32 1, %s5
  %s8 = scalar_select 0, %s7, %s5
  $region1: #{conv_apply.1} parent=0
    #allocation2 [shape = 'u8[262144]{0}', space=vmem, size = 0x40000, scoped, tag = 'output window, operand 0']
    #allocation3 [shape = 's32[2]{0}', space=sflag, size = 0x8, scoped, tag = 'scoped memory for conv_apply.1']
    %9 = vsyncpa [#allocation3], 0
    %s10 = scalar_lea.sflag [#allocation3], 1
    %11 = vsyncpa %s10, 0
    loop: start=0, step=1, limit=10
    $region2: #{conv_apply.1} parent=1 // loop_pre_header
      _
    $region3: #{conv_apply.1} parent=1 // loop_header
      %s13 = sphi 0, %s17
      %p14 = scmp.ge.s32.totalorder %s13, 10
      %s20 = sphi 0, %s32
      %s21 = sphi 0, %s28
      %s22 = sphi 0, %s20
      %s23 = sphi 0, %s21
      %s24 = sphi 0, %s22
      %s25 = sphi 0, %s23
      %s35 = sphi 0, %s37
      %s38 = sphi 0, %s35
      %s39 = sphi 0, %s38
      %s55 = sphi 0, %s39
      %s61 = sphi 0, %s63
      %s64 = sphi 0, %s61
      %s65 = sphi 0, %s64
      %s81 = sphi 0, %s65
      %s87 = sphi 0, %s89
      %s90 = sphi 0, %s87
      %s91 = sphi 0, %s90
      %s107 = sphi 0, %s91
      %s113 = sphi 0, %s115
      %s116 = sphi 0, %s113
      %s117 = sphi 0, %s116
      %s133 = sphi 0, %s117
      %s141 = sphi 0, %s143
      %s144 = sphi 0, %s141
      %s145 = sphi 0, %s144
      %s161 = sphi 0, %s145
    $region4: #{conv_apply.1} parent=1 // loop_header_branch
      %16 = sbr.rel (%p14) target = $region8
    $region5: #{conv_apply.1} parent=1 // loop_body
      %s18 = ssub.s32 %s13, 1
      %s19 = ssub.s32 %s13, 2
      %s26 = sadd.s32 1, %s21
      %p27 = scmp.ge.s32.totalorder %s26, 8
      %s28 = scalar_select %p27, 0, %s26
      %s29 = sadd.s32 1, %s20
      %s30 = scalar_select %p27, %s29, %s20
      %p31 = scmp.ge.s32.totalorder %s30, 1
      %s32 = scalar_select %p31, 0, %s30
      %s33 = ssub.s32 %s21, %s28
      %p34 = scmp.eq.s32.totalorder %s33, 0
      %s36 = sadd.s32 %s35, 1
      %s37 = scalar_select %p34, %s35, %s36
      %p40 = pneg %p34
      %p41 = scmp.eq.s32.totalorder %s13, 7
      %p42 = por %p40, %p41
      %p43 = scmp.ne.s32.totalorder %s35, %s38
      %p44 = scmp.eq.s32.totalorder %s13, 0
      %p45 = por %p43, %p44
      %p46 = scmp.ne.s32.totalorder %s35, %s38
      %p47 = scmp.eq.s32.totalorder %s18, 7
      %p48 = por %p46, %p47
      %p49 = scmp.ne.s32.totalorder %s38, %s39
      %p50 = scmp.eq.s32.totalorder %s18, 0
      %p51 = por %p49, %p50
      %p52 = scmp.ne.s32.totalorder %s38, %s39
      %p53 = scmp.eq.s32.totalorder %s19, 7
      %p54 = por %p52, %p53
      %p56 = scmp.ne.s32.totalorder %s39, %s55
      %p57 = scmp.eq.s32.totalorder %s19, 0
      %p58 = por %p56, %p57
      %s59 = ssub.s32 %s20, %s32
      %p60 = scmp.eq.s32.totalorder %s59, 0
      %s62 = sadd.s32 %s61, 1
      %s63 = scalar_select %p60, %s61, %s62
      %p66 = pneg %p60
      %p67 = scmp.eq.s32.totalorder %s13, 7
      %p68 = por %p66, %p67
      %p69 = scmp.ne.s32.totalorder %s61, %s64
      %p70 = scmp.eq.s32.totalorder %s13, 0
      %p71 = por %p69, %p70
      %p72 = scmp.ne.s32.totalorder %s61, %s64
      %p73 = scmp.eq.s32.totalorder %s18, 7
      %p74 = por %p72, %p73
      %p75 = scmp.ne.s32.totalorder %s64, %s65
      %p76 = scmp.eq.s32.totalorder %s18, 0
      %p77 = por %p75, %p76
      %p78 = scmp.ne.s32.totalorder %s64, %s65
      %p79 = scmp.eq.s32.totalorder %s19, 7
      %p80 = por %p78, %p79
      %p82 = scmp.ne.s32.totalorder %s65, %s81
      %p83 = scmp.eq.s32.totalorder %s19, 0
      %p84 = por %p82, %p83
      %s85 = ssub.s32 %s20, %s32
      %p86 = scmp.eq.s32.totalorder %s85, 0
      %s88 = sadd.s32 %s87, 1
      %s89 = scalar_select %p86, %s87, %s88
      %p92 = pneg %p86
      %p93 = scmp.eq.s32.totalorder %s13, 7
      %p94 = por %p92, %p93
      %p95 = scmp.ne.s32.totalorder %s87, %s90
      %p96 = scmp.eq.s32.totalorder %s13, 0
      %p97 = por %p95, %p96
      %p98 = scmp.ne.s32.totalorder %s87, %s90
      %p99 = scmp.eq.s32.totalorder %s18, 7
      %p100 = por %p98, %p99
      %p101 = scmp.ne.s32.totalorder %s90, %s91
      %p102 = scmp.eq.s32.totalorder %s18, 0
      %p103 = por %p101, %p102
      %p104 = scmp.ne.s32.totalorder %s90, %s91
      %p105 = scmp.eq.s32.totalorder %s19, 7
      %p106 = por %p104, %p105
      %p108 = scmp.ne.s32.totalorder %s91, %s107
      %p109 = scmp.eq.s32.totalorder %s19, 0
      %p110 = por %p108, %p109
      %s111 = ssub.s32 %s20, %s32
      %p112 = scmp.eq.s32.totalorder %s111, 0
      %s114 = sadd.s32 %s113, 1
      %s115 = scalar_select %p112, %s113, %s114
      %p118 = pneg %p112
      %p119 = scmp.eq.s32.totalorder %s13, 7
      %p120 = por %p118, %p119
      %p121 = scmp.ne.s32.totalorder %s113, %s116
      %p122 = scmp.eq.s32.totalorder %s13, 0
      %p123 = por %p121, %p122
      %p124 = scmp.ne.s32.totalorder %s113, %s116
      %p125 = scmp.eq.s32.totalorder %s18, 7
      %p126 = por %p124, %p125
      %p127 = scmp.ne.s32.totalorder %s116, %s117
      %p128 = scmp.eq.s32.totalorder %s18, 0
      %p129 = por %p127, %p128
      %p130 = scmp.ne.s32.totalorder %s116, %s117
      %p131 = scmp.eq.s32.totalorder %s19, 7
      %p132 = por %p130, %p131
      %p134 = scmp.ne.s32.totalorder %s117, %s133
      %p135 = scmp.eq.s32.totalorder %s19, 0
      %p136 = por %p134, %p135
      %s137 = ssub.s32 %s21, %s28
      %s138 = ssub.s32 %s20, %s32
      %s139 = sor.u32 %s137, %s138
      %p140 = scmp.eq.s32.totalorder %s139, 0
      %s142 = sadd.s32 %s141, 1
      %s143 = scalar_select %p140, %s141, %s142
      %p146 = pneg %p140
      %p147 = scmp.eq.s32.totalorder %s13, 7
      %p148 = por %p146, %p147
      %p149 = scmp.ne.s32.totalorder %s141, %s144
      %p150 = scmp.eq.s32.totalorder %s13, 0
      %p151 = por %p149, %p150
      %p152 = scmp.ne.s32.totalorder %s141, %s144
      %p153 = scmp.eq.s32.totalorder %s18, 7
      %p154 = por %p152, %p153
      %p155 = scmp.ne.s32.totalorder %s144, %s145
      %p156 = scmp.eq.s32.totalorder %s18, 0
      %p157 = por %p155, %p156
      %p158 = scmp.ne.s32.totalorder %s144, %s145
      %p159 = scmp.eq.s32.totalorder %s19, 7
      %p160 = por %p158, %p159
      %p162 = scmp.ne.s32.totalorder %s145, %s161
      %p163 = scmp.eq.s32.totalorder %s19, 0
      %p164 = por %p162, %p163
      %p165 = scmp.le.s32.totalorder 1, %s13
      %p166 = scmp.lt.s32.totalorder %s13, 9
      %p167 = pnand %p165, %p166
      %p168 = pneg %p167
      // Predicated region
      $region9: #{conv_apply.1} parent=5 // pred_check
        _
      $region10: #{conv_apply.1} parent=5 // pred_check_branch
        %170 = sbr.rel (%p167) target = $region12
      $region11: #{conv_apply.1} parent=5 // pred_region
        %s171 = ssub.s32 %s13, 1
        // Predicated region
        $region13: #{conv_apply.1} parent=11 // pred_check
          %p172 = pneg %p77
        $region14: #{conv_apply.1} parent=11 // pred_check_branch
          %174 = sbr.rel (%p172) target = $region16
        $region15: #{conv_apply.1} parent=11 // pred_region
          %p175 = scmp.lt.s32.totalorder %s22, 0
          %s176 = scalar_select %p175, %s22, 0
          %s177 = smul.addr %s176, 4
          %s178 = scalar_lea.vmem %s1, %s177
        $region16: #{conv_apply.1} parent=11 // pred_fallthru
          _
        // Predicated region
        $region17: #{conv_apply.1} parent=11 // pred_check
          %p179 = pneg %p103
        $region18: #{conv_apply.1} parent=11 // pred_check_branch
          %181 = sbr.rel (%p179) target = $region20
        $region19: #{conv_apply.1} parent=11 // pred_region
          %p182 = scmp.lt.s32.totalorder %s22, 0
          %s183 = scalar_select %p182, %s22, 0
          %s184 = scalar_lea.vmem %s2, %s183
        $region20: #{conv_apply.1} parent=11 // pred_fallthru
          _
        // Predicated region
        $region21: #{conv_apply.1} parent=11 // pred_check
          %p185 = pneg %p129
        $region22: #{conv_apply.1} parent=11 // pred_check_branch
          %187 = sbr.rel (%p185) target = $region24
        $region23: #{conv_apply.1} parent=11 // pred_region
          %p188 = scmp.lt.s32.totalorder %s22, 0
          %s189 = scalar_select %p188, %s22, 0
          %s190 = scalar_lea.vmem %s3, %s189
        $region24: #{conv_apply.1} parent=11 // pred_fallthru
          _
      $region12: #{conv_apply.1} parent=5 // pred_fallthru
        _
      %p191 = scmp.lt.s32.totalorder %s13, 8
      // Predicated region
      $region25: #{conv_apply.1} parent=5 // pred_check
        %p192 = pneg %p191
      $region26: #{conv_apply.1} parent=5 // pred_check_branch
        %194 = sbr.rel (%p192) target = $region28
      $region27: #{conv_apply.1} parent=5 // pred_region
        // Predicated region
        $region29: #{conv_apply.1} parent=27 // pred_check
          %p195 = pneg %p45
        $region30: #{conv_apply.1} parent=27 // pred_check_branch
          %197 = sbr.rel (%p195) target = $region32
        $region31: #{conv_apply.1} parent=27 // pred_region
          %s198 = smul.u32 32, %s21
          %p199 = scmp.lt.s32.totalorder %s198, 255
          %s200 = scalar_select %p199, %s198, 255
          %s201 = smul.addr %s200, 2
          %s202 = smul.addr %s201, 4
          %s203 = scalar_lea.vmem %s0, %s202
          %s204 = smul.u32 32, %s21
        $region32: #{conv_apply.1} parent=27 // pred_fallthru
          _
      $region28: #{conv_apply.1} parent=5 // pred_fallthru
        _
      %p205 = scmp.le.s32.totalorder 1, %s13
      %p206 = scmp.lt.s32.totalorder %s13, 9
      %p207 = pnand %p205, %p206
      %p208 = pneg %p207
      // Predicated region
      $region33: #{conv_apply.1} parent=5 // pred_check
        _
      $region34: #{conv_apply.1} parent=5 // pred_check_branch
        %210 = sbr.rel (%p207) target = $region36
      $region35: #{conv_apply.1} parent=5 // pred_region
        %s211 = ssub.s32 %s13, 1
        %s212 = smul.u32 32, %s23
        %p213 = scmp.lt.s32.totalorder %s212, 255
        %s214 = scalar_select %p213, %s212, 255
        %s215 = smul.addr %s214, 2
        %s216 = smul.addr %s215, 4
        %s217 = scalar_lea.vmem %s0, %s216
        %p218 = pneg %p51
        %p219 = pneg %p48
        %p220 = scmp.lt.s32.totalorder %s22, 0
        %s221 = scalar_select %p220, %s22, 0
        %s222 = smul.addr %s221, 4
        %s223 = scalar_lea.vmem %s1, %s222
        %p224 = pneg %p77
        %p225 = pneg %p74
        %p226 = scmp.lt.s32.totalorder %s22, 0
        %s227 = scalar_select %p226, %s22, 0
        %s228 = scalar_lea.vmem %s2, %s227
        %p229 = pneg %p103
        %p230 = pneg %p100
        %p231 = scmp.lt.s32.totalorder %s22, 0
        %s232 = scalar_select %p231, %s22, 0
        %s233 = scalar_lea.vmem %s3, %s232
        %p234 = pneg %p129
        %p235 = pneg %p126
        %p236 = pneg %p157
        %p237 = pneg %p154
        %s238 = sand.u32 %s144, 1
        %s239 = scalar_lea.sflag [#allocation3], %s238
        %s240 = sand.u32 %s144, 1
        %s241 = smul.addr %s240, 256
        %s242 = scalar_lea.vmem [#allocation2], %s241
        %s243 = smul.u32 32, %s23
        %p244 = scmp.lt.s32.totalorder %s243, 255
        %s245 = scalar_select %p244, %s243, 255
        %s246 = smul.addr %s245, 2
        %s247 = smul.addr %s246, 4
        %s248 = scalar_lea.vmem %s0, %s247
        %s249 = smul.u32 32, %s23
        %p250 = scmp.lt.s32.totalorder %s22, 0
        %s251 = scalar_select %p250, %s22, 0
        %s252 = smul.addr %s251, 4
        %s253 = scalar_lea.vmem %s1, %s252
        %p254 = scmp.lt.s32.totalorder %s22, 0
        %s255 = scalar_select %p254, %s22, 0
        %s256 = scalar_lea.vmem %s2, %s255
        %p257 = scmp.lt.s32.totalorder %s22, 0
        %s258 = scalar_select %p257, %s22, 0
        %s259 = scalar_lea.vmem %s3, %s258
        %s260 = smul.u32 32, %s23
        %v262 = vld [vmem:[%s248] sm:$0xff]
        %v263 = vld [vmem:[%s248 + $0x8] sm:$0xff]
        %v264 = vld [vmem:[%s248 + $0x10] sm:$0xff]
        %v265 = vld [vmem:[%s248 + $0x18] sm:$0xff]
        %v266 = vld [vmem:[%s248 + $0x20] sm:$0xff]
        %v267 = vld [vmem:[%s248 + $0x28] sm:$0xff]
        %v268 = vld [vmem:[%s248 + $0x30] sm:$0xff]
        %v269 = vld [vmem:[%s248 + $0x38] sm:$0xff]
        %v270 = vld [vmem:[%s248 + $0x40] sm:$0xff]
        %v271 = vld [vmem:[%s248 + $0x48] sm:$0xff]
        %v272 = vld [vmem:[%s248 + $0x50] sm:$0xff]
        %v273 = vld [vmem:[%s248 + $0x58] sm:$0xff]
        %v274 = vld [vmem:[%s248 + $0x60] sm:$0xff]
        %v275 = vld [vmem:[%s248 + $0x68] sm:$0xff]
        %v276 = vld [vmem:[%s248 + $0x70] sm:$0xff]
        %v277 = vld [vmem:[%s248 + $0x78] sm:$0xff]
        %v278 = vld [vmem:[%s248 + $0x80] sm:$0xff]
        %v279 = vld [vmem:[%s248 + $0x88] sm:$0xff]
        %v280 = vld [vmem:[%s248 + $0x90] sm:$0xff]
        %v281 = vld [vmem:[%s248 + $0x98] sm:$0xff]
        %v282 = vld [vmem:[%s248 + $0xa0] sm:$0xff]
        %v283 = vld [vmem:[%s248 + $0xa8] sm:$0xff]
        %v284 = vld [vmem:[%s248 + $0xb0] sm:$0xff]
        %v285 = vld [vmem:[%s248 + $0xb8] sm:$0xff]
        %v286 = vld [vmem:[%s248 + $0xc0] sm:$0xff]
        %v287 = vld [vmem:[%s248 + $0xc8] sm:$0xff]
        %v288 = vld [vmem:[%s248 + $0xd0] sm:$0xff]
        %v289 = vld [vmem:[%s248 + $0xd8] sm:$0xff]
        %v290 = vld [vmem:[%s248 + $0xe0] sm:$0xff]
        %v291 = vld [vmem:[%s248 + $0xe8] sm:$0xff]
        %v292 = vld [vmem:[%s248 + $0xf0] sm:$0xff]
        %v293 = vld [vmem:[%s248 + $0xf8] sm:$0xff]
        %v294 = vld [vmem:[%s253] sm:$0xf]
        %v295 = vld [vmem:[%s253 + $0x4] sm:$0xf]
        %v296 = vld [vmem:[%s253 + $0x8] sm:$0xf]
        %v297 = vld [vmem:[%s253 + $0xc] sm:$0xf]
        %v298 = vld [vmem:[%s253 + $0x10] sm:$0xf]
        %v299 = vld [vmem:[%s253 + $0x14] sm:$0xf]
        %v300 = vld [vmem:[%s253 + $0x18] sm:$0xf]
        %v301 = vld [vmem:[%s253 + $0x1c] sm:$0xf]
        %v302 = vld [vmem:[%s253 + $0x20] sm:$0xf]
        %v303 = vld [vmem:[%s253 + $0x24] sm:$0xf]
        %v304 = vld [vmem:[%s253 + $0x28] sm:$0xf]
        %v305 = vld [vmem:[%s253 + $0x2c] sm:$0xf]
        %v306 = vld [vmem:[%s253 + $0x30] sm:$0xf]
        %v307 = vld [vmem:[%s253 + $0x34] sm:$0xf]
        %v308 = vld [vmem:[%s253 + $0x38] sm:$0xf]
        %v309 = vld [vmem:[%s253 + $0x3c] sm:$0xf]
        %v310 = vld [vmem:[%s253 + $0x40] sm:$0xf]
        %v311 = vld [vmem:[%s253 + $0x44] sm:$0xf]
        %v312 = vld [vmem:[%s253 + $0x48] sm:$0xf]
        %v313 = vld [vmem:[%s253 + $0x4c] sm:$0xf]
        %v314 = vld [vmem:[%s253 + $0x50] sm:$0xf]
        %v315 = vld [vmem:[%s253 + $0x54] sm:$0xf]
        %v316 = vld [vmem:[%s253 + $0x58] sm:$0xf]
        %v317 = vld [vmem:[%s253 + $0x5c] sm:$0xf]
        %v318 = vld [vmem:[%s253 + $0x60] sm:$0xf]
        %v319 = vld [vmem:[%s253 + $0x64] sm:$0xf]
        %v320 = vld [vmem:[%s253 + $0x68] sm:$0xf]
        %v321 = vld [vmem:[%s253 + $0x6c] sm:$0xf]
        %v322 = vld [vmem:[%s253 + $0x70] sm:$0xf]
        %v323 = vld [vmem:[%s253 + $0x74] sm:$0xf]
        %v324 = vld [vmem:[%s253 + $0x78] sm:$0xf]
        %v325 = vld [vmem:[%s253 + $0x7c] sm:$0xf]
        %v358 = vunpack.c.l.b16 %v262
        %v359 = vunpack.c.h.b16 %v262
        %v360 = vunpack.c.l.b16 %v263
        %v361 = vunpack.c.h.b16 %v263
        %v362 = vunpack.c.l.b16 %v264
        %v363 = vunpack.c.h.b16 %v264
        %v364 = vunpack.c.l.b16 %v265
        %v365 = vunpack.c.h.b16 %v265
        %v366 = vunpack.c.l.b16 %v266
        %v367 = vunpack.c.h.b16 %v266
        %v368 = vunpack.c.l.b16 %v267
        %v369 = vunpack.c.h.b16 %v267
        %v370 = vunpack.c.l.b16 %v268
        %v371 = vunpack.c.h.b16 %v268
        %v372 = vunpack.c.l.b16 %v269
        %v373 = vunpack.c.h.b16 %v269
        %v374 = vunpack.c.l.b16 %v270
        %v375 = vunpack.c.h.b16 %v270
        %v376 = vunpack.c.l.b16 %v271
        %v377 = vunpack.c.h.b16 %v271
        %v378 = vunpack.c.l.b16 %v272
        %v379 = vunpack.c.h.b16 %v272
        %v380 = vunpack.c.l.b16 %v273
        %v381 = vunpack.c.h.b16 %v273
        %v382 = vunpack.c.l.b16 %v274
        %v383 = vunpack.c.h.b16 %v274
        %v384 = vunpack.c.l.b16 %v275
        %v385 = vunpack.c.h.b16 %v275
        %v386 = vunpack.c.l.b16 %v276
        %v387 = vunpack.c.h.b16 %v276
        %v388 = vunpack.c.l.b16 %v277
        %v389 = vunpack.c.h.b16 %v277
        %v390 = vunpack.c.l.b16 %v278
        %v391 = vunpack.c.h.b16 %v278
        %v392 = vunpack.c.l.b16 %v279
        %v393 = vunpack.c.h.b16 %v279
        %v394 = vunpack.c.l.b16 %v280
        %v395 = vunpack.c.h.b16 %v280
        %v396 = vunpack.c.l.b16 %v281
        %v397 = vunpack.c.h.b16 %v281
        %v398 = vunpack.c.l.b16 %v282
        %v399 = vunpack.c.h.b16 %v282
        %v400 = vunpack.c.l.b16 %v283
        %v401 = vunpack.c.h.b16 %v283
        %v402 = vunpack.c.l.b16 %v284
        %v403 = vunpack.c.h.b16 %v284
        %v404 = vunpack.c.l.b16 %v285
        %v405 = vunpack.c.h.b16 %v285
        %v406 = vunpack.c.l.b16 %v286
        %v407 = vunpack.c.h.b16 %v286
        %v408 = vunpack.c.l.b16 %v287
        %v409 = vunpack.c.h.b16 %v287
        %v410 = vunpack.c.l.b16 %v288
        %v411 = vunpack.c.h.b16 %v288
        %v412 = vunpack.c.l.b16 %v289
        %v413 = vunpack.c.h.b16 %v289
        %v414 = vunpack.c.l.b16 %v290
        %v415 = vunpack.c.h.b16 %v290
        %v416 = vunpack.c.l.b16 %v291
        %v417 = vunpack.c.h.b16 %v291
        %v418 = vunpack.c.l.b16 %v292
        %v419 = vunpack.c.h.b16 %v292
        %v420 = vunpack.c.l.b16 %v293
        %v421 = vunpack.c.h.b16 %v293
        %v422 = vpack.c.b16 %v360, %v358
        %v423 = vpack.c.b16 %v361, %v359
        %v424 = vpack.c.b16 %v364, %v362
        %v425 = vpack.c.b16 %v365, %v363
        %v426 = vpack.c.b16 %v368, %v366
        %v427 = vpack.c.b16 %v369, %v367
        %v428 = vpack.c.b16 %v372, %v370
        %v429 = vpack.c.b16 %v373, %v371
        %v430 = vpack.c.b16 %v376, %v374
        %v431 = vpack.c.b16 %v377, %v375
        %v432 = vpack.c.b16 %v380, %v378
        %v433 = vpack.c.b16 %v381, %v379
        %v434 = vpack.c.b16 %v384, %v382
        %v435 = vpack.c.b16 %v385, %v383
        %v436 = vpack.c.b16 %v388, %v386
        %v437 = vpack.c.b16 %v389, %v387
        %v438 = vpack.c.b16 %v392, %v390
        %v439 = vpack.c.b16 %v393, %v391
        %v440 = vpack.c.b16 %v396, %v394
        %v441 = vpack.c.b16 %v397, %v395
        %v442 = vpack.c.b16 %v400, %v398
        %v443 = vpack.c.b16 %v401, %v399
        %v444 = vpack.c.b16 %v404, %v402
        %v445 = vpack.c.b16 %v405, %v403
        %v446 = vpack.c.b16 %v408, %v406
        %v447 = vpack.c.b16 %v409, %v407
        %v448 = vpack.c.b16 %v412, %v410
        %v449 = vpack.c.b16 %v413, %v411
        %v450 = vpack.c.b16 %v416, %v414
        %v451 = vpack.c.b16 %v417, %v415
        %v452 = vpack.c.b16 %v420, %v418
        %v453 = vpack.c.b16 %v421, %v419
        %v518 = vunpack.c.l.b16 %v294
        %v519 = vunpack.c.l.b16 %v295
        %v520 = vunpack.c.l.b16 %v296
        %v521 = vunpack.c.l.b16 %v297
        %v522 = vunpack.c.l.b16 %v298
        %v523 = vunpack.c.l.b16 %v299
        %v524 = vunpack.c.l.b16 %v300
        %v525 = vunpack.c.l.b16 %v301
        %v526 = vunpack.c.l.b16 %v302
        %v527 = vunpack.c.l.b16 %v303
        %v528 = vunpack.c.l.b16 %v304
        %v529 = vunpack.c.l.b16 %v305
        %v530 = vunpack.c.l.b16 %v306
        %v531 = vunpack.c.l.b16 %v307
        %v532 = vunpack.c.l.b16 %v308
        %v533 = vunpack.c.l.b16 %v309
        %v534 = vunpack.c.l.b16 %v310
        %v535 = vunpack.c.l.b16 %v311
        %v536 = vunpack.c.l.b16 %v312
        %v537 = vunpack.c.l.b16 %v313
        %v538 = vunpack.c.l.b16 %v314
        %v539 = vunpack.c.l.b16 %v315
        %v540 = vunpack.c.l.b16 %v316
        %v541 = vunpack.c.l.b16 %v317
        %v542 = vunpack.c.l.b16 %v318
        %v543 = vunpack.c.l.b16 %v319
        %v544 = vunpack.c.l.b16 %v320
        %v545 = vunpack.c.l.b16 %v321
        %v546 = vunpack.c.l.b16 %v322
        %v547 = vunpack.c.l.b16 %v323
        %v548 = vunpack.c.l.b16 %v324
        %v549 = vunpack.c.l.b16 %v325
        %v550 = vpack.c.b16 %v519, %v518
        %v551 = vpack.c.b16 %v521, %v520
        %v552 = vpack.c.b16 %v523, %v522
        %v553 = vpack.c.b16 %v525, %v524
        %v554 = vpack.c.b16 %v527, %v526
        %v555 = vpack.c.b16 %v529, %v528
        %v556 = vpack.c.b16 %v531, %v530
        %v557 = vpack.c.b16 %v533, %v532
        %v558 = vpack.c.b16 %v535, %v534
        %v559 = vpack.c.b16 %v537, %v536
        %v560 = vpack.c.b16 %v539, %v538
        %v561 = vpack.c.b16 %v541, %v540
        %v562 = vpack.c.b16 %v543, %v542
        %v563 = vpack.c.b16 %v545, %v544
        %v564 = vpack.c.b16 %v547, %v546
        %v565 = vpack.c.b16 %v549, %v548
        %582 = vmatprep.subr.bf16.mxu0 0
        %583 = vmatpush1.bf16.msra.mxu0 %v557
        %584 = vmatprep.subr.bf16.mxu0 0
        %585 = vmatpush1.bf16.msra.mxu0 %v556
        %586 = vmatprep.subr.bf16.mxu0 0
        %587 = vmatpush1.bf16.msra.mxu0 %v555
        %588 = vmatprep.subr.bf16.mxu0 0
        %589 = vmatpush1.bf16.msra.mxu0 %v554
        %590 = vmatprep.subr.bf16.mxu0 0
        %591 = vmatpush1.bf16.msra.mxu0 %v553
        %592 = vmatprep.subr.bf16.mxu0 0
        %593 = vmatpush1.bf16.msra.mxu0 %v552
        %594 = vmatprep.subr.bf16.mxu0 0
        %595 = vmatpush1.bf16.msra.mxu0 %v551
        %596 = vmatprep.subr.bf16.mxu0 0
        %597 = vmatpush1.bf16.msra.mxu0 %v550
        %598 = vmatprep.subr.bf16.mxu0 0
        %599 = vmatpush2.bf16.msra.mxu0 %v565
        %600 = vmatprep.subr.bf16.mxu0 0
        %601 = vmatpush2.bf16.msra.mxu0 %v564
        %602 = vmatprep.subr.bf16.mxu0 0
        %603 = vmatpush2.bf16.msra.mxu0 %v563
        %604 = vmatprep.subr.bf16.mxu0 0
        %605 = vmatpush2.bf16.msra.mxu0 %v562
        %606 = vmatprep.subr.bf16.mxu0 0
        %607 = vmatpush2.bf16.msra.mxu0 %v561
        %608 = vmatprep.subr.bf16.mxu0 0
        %609 = vmatpush2.bf16.msra.mxu0 %v560
        %610 = vmatprep.subr.bf16.mxu0 0
        %611 = vmatpush2.bf16.msra.mxu0 %v559
        %612 = vmatprep.subr.bf16.mxu0 0
        %613 = vmatpush2.bf16.msra.mxu0 %v558
        %614 = vmatprep.mubr.bf16.mxu0 %v423
        %615 = vmatmul.mubr.bf16.gmra.mxu0 %v422
        %v616 = vpop.f32.mrf.mxu0
        %v617 = vadd.f32 0.0, %v616
        %v618 = vpop.f32.mrf.mxu0
        %v619 = vpop.f32.mrf.mxu0
        %v620 = vadd.f32 0.0, %v619
        %v621 = vpop.f32.mrf.mxu0
        %622 = vmatprep.mubr.bf16.mxu0 %v425
        %623 = vmatmul.mubr.bf16.gmra.mxu0 %v424
        %v624 = vpop.f32.mrf.mxu0
        %v625 = vadd.f32 0.0, %v624
        %v626 = vpop.f32.mrf.mxu0
        %v627 = vpop.f32.mrf.mxu0
        %v628 = vadd.f32 0.0, %v627
        %v629 = vpop.f32.mrf.mxu0
        %630 = vmatprep.mubr.bf16.mxu0 %v427
        %631 = vmatmul.mubr.bf16.gmra.mxu0 %v426
        %v632 = vpop.f32.mrf.mxu0
        %v633 = vadd.f32 0.0, %v632
        %v634 = vpop.f32.mrf.mxu0
        %v635 = vpop.f32.mrf.mxu0
        %v636 = vadd.f32 0.0, %v635
        %v637 = vpop.f32.mrf.mxu0
        %638 = vmatprep.mubr.bf16.mxu0 %v429
        %639 = vmatmul.mubr.bf16.gmra.mxu0 %v428
        %v640 = vpop.f32.mrf.mxu0
        %v641 = vadd.f32 0.0, %v640
        %v642 = vpop.f32.mrf.mxu0
        %v643 = vpop.f32.mrf.mxu0
        %v644 = vadd.f32 0.0, %v643
        %v645 = vpop.f32.mrf.mxu0
        %646 = vmatprep.mubr.bf16.mxu0 %v431
        %647 = vmatmul.mubr.bf16.gmra.mxu0 %v430
        %v648 = vpop.f32.mrf.mxu0
        %v649 = vadd.f32 0.0, %v648
        %v650 = vpop.f32.mrf.mxu0
        %v651 = vpop.f32.mrf.mxu0
        %v652 = vadd.f32 0.0, %v651
        %v653 = vpop.f32.mrf.mxu0
        %654 = vmatprep.mubr.bf16.mxu0 %v433
        %655 = vmatmul.mubr.bf16.gmra.mxu0 %v432
        %v656 = vpop.f32.mrf.mxu0
        %v657 = vadd.f32 0.0, %v656
        %v658 = vpop.f32.mrf.mxu0
        %v659 = vpop.f32.mrf.mxu0
        %v660 = vadd.f32 0.0, %v659
        %v661 = vpop.f32.mrf.mxu0
        %662 = vmatprep.mubr.bf16.mxu0 %v435
        %663 = vmatmul.mubr.bf16.gmra.mxu0 %v434
        %v664 = vpop.f32.mrf.mxu0
        %v665 = vadd.f32 0.0, %v664
        %v666 = vpop.f32.mrf.mxu0
        %v667 = vpop.f32.mrf.mxu0
        %v668 = vadd.f32 0.0, %v667
        %v669 = vpop.f32.mrf.mxu0
        %670 = vmatprep.mubr.bf16.mxu0 %v437
        %671 = vmatmul.mubr.bf16.gmra.mxu0 %v436
        %v672 = vpop.f32.mrf.mxu0
        %v673 = vadd.f32 0.0, %v672
        %v674 = vpop.f32.mrf.mxu0
        %v675 = vpop.f32.mrf.mxu0
        %v676 = vadd.f32 0.0, %v675
        %v677 = vpop.f32.mrf.mxu0
        %678 = vmatprep.mubr.bf16.mxu0 %v439
        %679 = vmatmul.mubr.bf16.gmra.mxu0 %v438
        %v680 = vpop.f32.mrf.mxu0
        %v681 = vadd.f32 0.0, %v680
        %v682 = vpop.f32.mrf.mxu0
        %v683 = vpop.f32.mrf.mxu0
        %v684 = vadd.f32 0.0, %v683
        %v685 = vpop.f32.mrf.mxu0
        %686 = vmatprep.mubr.bf16.mxu0 %v441
        %687 = vmatmul.mubr.bf16.gmra.mxu0 %v440
        %v688 = vpop.f32.mrf.mxu0
        %v689 = vadd.f32 0.0, %v688
        %v690 = vpop.f32.mrf.mxu0
        %v691 = vpop.f32.mrf.mxu0
        %v692 = vadd.f32 0.0, %v691
        %v693 = vpop.f32.mrf.mxu0
        %694 = vmatprep.mubr.bf16.mxu0 %v443
        %695 = vmatmul.mubr.bf16.gmra.mxu0 %v442
        %v696 = vpop.f32.mrf.mxu0
        %v697 = vadd.f32 0.0, %v696
        %v698 = vpop.f32.mrf.mxu0
        %v699 = vpop.f32.mrf.mxu0
        %v700 = vadd.f32 0.0, %v699
        %v701 = vpop.f32.mrf.mxu0
        %702 = vmatprep.mubr.bf16.mxu0 %v445
        %703 = vmatmul.mubr.bf16.gmra.mxu0 %v444
        %v704 = vpop.f32.mrf.mxu0
        %v705 = vadd.f32 0.0, %v704
        %v706 = vpop.f32.mrf.mxu0
        %v707 = vpop.f32.mrf.mxu0
        %v708 = vadd.f32 0.0, %v707
        %v709 = vpop.f32.mrf.mxu0
        %710 = vmatprep.mubr.bf16.mxu0 %v447
        %711 = vmatmul.mubr.bf16.gmra.mxu0 %v446
        %v712 = vpop.f32.mrf.mxu0
        %v713 = vadd.f32 0.0, %v712
        %v714 = vpop.f32.mrf.mxu0
        %v715 = vpop.f32.mrf.mxu0
        %v716 = vadd.f32 0.0, %v715
        %v717 = vpop.f32.mrf.mxu0
        %718 = vmatprep.mubr.bf16.mxu0 %v449
        %719 = vmatmul.mubr.bf16.gmra.mxu0 %v448
        %v720 = vpop.f32.mrf.mxu0
        %v721 = vadd.f32 0.0, %v720
        %v722 = vpop.f32.mrf.mxu0
        %v723 = vpop.f32.mrf.mxu0
        %v724 = vadd.f32 0.0, %v723
        %v725 = vpop.f32.mrf.mxu0
        %726 = vmatprep.mubr.bf16.mxu0 %v451
        %727 = vmatmul.mubr.bf16.gmra.mxu0 %v450
        %v728 = vpop.f32.mrf.mxu0
        %v729 = vadd.f32 0.0, %v728
        %v730 = vpop.f32.mrf.mxu0
        %v731 = vpop.f32.mrf.mxu0
        %v732 = vadd.f32 0.0, %v731
        %v733 = vpop.f32.mrf.mxu0
        %734 = vmatprep.mubr.bf16.mxu0 %v453
        %735 = vmatmul.mubr.bf16.gmra.mxu0 %v452
        %v736 = vpop.f32.mrf.mxu0
        %v737 = vadd.f32 0.0, %v736
        %v738 = vpop.f32.mrf.mxu0
        %v739 = vpop.f32.mrf.mxu0
        %v740 = vadd.f32 0.0, %v739
        %v741 = vpop.f32.mrf.mxu0
        %742 = vdwg.mxu0
        %v743 = vld [vmem:[%s256] sm:$0x1]
        %v745 = vlaneseq
        %v746 = vshrl.u32 %v745, 7
        %v747 = vsub.s32 0, %v746
        %v748 = vrot.slane %v743, %v747
        %v750 = vmul.f32 %v617, %v748
        %v751 = vmul.f32 %v620, %v748
        %v752 = vmul.f32 %v625, %v748
        %v753 = vmul.f32 %v628, %v748
        %v754 = vmul.f32 %v633, %v748
        %v755 = vmul.f32 %v636, %v748
        %v756 = vmul.f32 %v641, %v748
        %v757 = vmul.f32 %v644, %v748
        %v758 = vmul.f32 %v649, %v748
        %v759 = vmul.f32 %v652, %v748
        %v760 = vmul.f32 %v657, %v748
        %v761 = vmul.f32 %v660, %v748
        %v762 = vmul.f32 %v665, %v748
        %v763 = vmul.f32 %v668, %v748
        %v764 = vmul.f32 %v673, %v748
        %v765 = vmul.f32 %v676, %v748
        %v766 = vmul.f32 %v681, %v748
        %v767 = vmul.f32 %v684, %v748
        %v768 = vmul.f32 %v689, %v748
        %v769 = vmul.f32 %v692, %v748
        %v770 = vmul.f32 %v697, %v748
        %v771 = vmul.f32 %v700, %v748
        %v772 = vmul.f32 %v705, %v748
        %v773 = vmul.f32 %v708, %v748
        %v774 = vmul.f32 %v713, %v748
        %v775 = vmul.f32 %v716, %v748
        %v776 = vmul.f32 %v721, %v748
        %v777 = vmul.f32 %v724, %v748
        %v778 = vmul.f32 %v729, %v748
        %v779 = vmul.f32 %v732, %v748
        %v780 = vmul.f32 %v737, %v748
        %v781 = vmul.f32 %v740, %v748
        %v782 = vld [vmem:[%s259] sm:$0x1]
        %v784 = vlaneseq
        %v785 = vshrl.u32 %v784, 7
        %v786 = vsub.s32 0, %v785
        %v787 = vrot.slane %v782, %v786
        %v789 = vadd.f32 %v750, %v787
        %v790 = vadd.f32 %v751, %v787
        %v791 = vadd.f32 %v752, %v787
        %v792 = vadd.f32 %v753, %v787
        %v793 = vadd.f32 %v754, %v787
        %v794 = vadd.f32 %v755, %v787
        %v795 = vadd.f32 %v756, %v787
        %v796 = vadd.f32 %v757, %v787
        %v797 = vadd.f32 %v758, %v787
        %v798 = vadd.f32 %v759, %v787
        %v799 = vadd.f32 %v760, %v787
        %v800 = vadd.f32 %v761, %v787
        %v801 = vadd.f32 %v762, %v787
        %v802 = vadd.f32 %v763, %v787
        %v803 = vadd.f32 %v764, %v787
        %v804 = vadd.f32 %v765, %v787
        %v805 = vadd.f32 %v766, %v787
        %v806 = vadd.f32 %v767, %v787
        %v807 = vadd.f32 %v768, %v787
        %v808 = vadd.f32 %v769, %v787
        %v809 = vadd.f32 %v770, %v787
        %v810 = vadd.f32 %v771, %v787
        %v811 = vadd.f32 %v772, %v787
        %v812 = vadd.f32 %v773, %v787
        %v813 = vadd.f32 %v774, %v787
        %v814 = vadd.f32 %v775, %v787
        %v815 = vadd.f32 %v776, %v787
        %v816 = vadd.f32 %v777, %v787
        %v817 = vadd.f32 %v778, %v787
        %v818 = vadd.f32 %v779, %v787
        %v819 = vadd.f32 %v780, %v787
        %v820 = vadd.f32 %v781, %v787
        %v821 = vmax.f32 %v789, 0.0
        %v822 = vmax.f32 %v790, 0.0
        %v823 = vmax.f32 %v791, 0.0
        %v824 = vmax.f32 %v792, 0.0
        %v825 = vmax.f32 %v793, 0.0
        %v826 = vmax.f32 %v794, 0.0
        %v827 = vmax.f32 %v795, 0.0
        %v828 = vmax.f32 %v796, 0.0
        %v829 = vmax.f32 %v797, 0.0
        %v830 = vmax.f32 %v798, 0.0
        %v831 = vmax.f32 %v799, 0.0
        %v832 = vmax.f32 %v800, 0.0
        %v833 = vmax.f32 %v801, 0.0
        %v834 = vmax.f32 %v802, 0.0
        %v835 = vmax.f32 %v803, 0.0
        %v836 = vmax.f32 %v804, 0.0
        %v837 = vmax.f32 %v805, 0.0
        %v838 = vmax.f32 %v806, 0.0
        %v839 = vmax.f32 %v807, 0.0
        %v840 = vmax.f32 %v808, 0.0
        %v841 = vmax.f32 %v809, 0.0
        %v842 = vmax.f32 %v810, 0.0
        %v843 = vmax.f32 %v811, 0.0
        %v844 = vmax.f32 %v812, 0.0
        %v845 = vmax.f32 %v813, 0.0
        %v846 = vmax.f32 %v814, 0.0
        %v847 = vmax.f32 %v815, 0.0
        %v848 = vmax.f32 %v816, 0.0
        %v849 = vmax.f32 %v817, 0.0
        %v850 = vmax.f32 %v818, 0.0
        %v851 = vmax.f32 %v819, 0.0
        %v852 = vmax.f32 %v820, 0.0
        %853 = vst [vmem:[%s242] sm:$0xff] %v821
        %854 = vst [vmem:[%s242 + $0x8] sm:$0xff] %v822
        %855 = vst [vmem:[%s242 + $0x10] sm:$0xff] %v823
        %856 = vst [vmem:[%s242 + $0x18] sm:$0xff] %v824
        %857 = vst [vmem:[%s242 + $0x20] sm:$0xff] %v825
        %858 = vst [vmem:[%s242 + $0x28] sm:$0xff] %v826
        %859 = vst [vmem:[%s242 + $0x30] sm:$0xff] %v827
        %860 = vst [vmem:[%s242 + $0x38] sm:$0xff] %v828
        %861 = vst [vmem:[%s242 + $0x40] sm:$0xff] %v829
        %862 = vst [vmem:[%s242 + $0x48] sm:$0xff] %v830
        %863 = vst [vmem:[%s242 + $0x50] sm:$0xff] %v831
        %864 = vst [vmem:[%s242 + $0x58] sm:$0xff] %v832
        %865 = vst [vmem:[%s242 + $0x60] sm:$0xff] %v833
        %866 = vst [vmem:[%s242 + $0x68] sm:$0xff] %v834
        %867 = vst [vmem:[%s242 + $0x70] sm:$0xff] %v835
        %868 = vst [vmem:[%s242 + $0x78] sm:$0xff] %v836
        %869 = vst [vmem:[%s242 + $0x80] sm:$0xff] %v837
        %870 = vst [vmem:[%s242 + $0x88] sm:$0xff] %v838
        %871 = vst [vmem:[%s242 + $0x90] sm:$0xff] %v839
        %872 = vst [vmem:[%s242 + $0x98] sm:$0xff] %v840
        %873 = vst [vmem:[%s242 + $0xa0] sm:$0xff] %v841
        %874 = vst [vmem:[%s242 + $0xa8] sm:$0xff] %v842
        %875 = vst [vmem:[%s242 + $0xb0] sm:$0xff] %v843
        %876 = vst [vmem:[%s242 + $0xb8] sm:$0xff] %v844
        %877 = vst [vmem:[%s242 + $0xc0] sm:$0xff] %v845
        %878 = vst [vmem:[%s242 + $0xc8] sm:$0xff] %v846
        %879 = vst [vmem:[%s242 + $0xd0] sm:$0xff] %v847
        %880 = vst [vmem:[%s242 + $0xd8] sm:$0xff] %v848
        %881 = vst [vmem:[%s242 + $0xe0] sm:$0xff] %v849
        %882 = vst [vmem:[%s242 + $0xe8] sm:$0xff] %v850
        %883 = vst [vmem:[%s242 + $0xf0] sm:$0xff] %v851
        %884 = vst [vmem:[%s242 + $0xf8] sm:$0xff] %v852
        %s885 = sand.u32 %s144, 1
        %s886 = scalar_lea.sflag [#allocation3], %s885
        %s887 = sand.u32 %s144, 1
        %s888 = smul.addr %s887, 256
        %s889 = scalar_lea.vmem [#allocation2], %s888
        // Predicated region
        $region37: #{conv_apply.1} parent=35 // pred_check
          %p890 = pneg %p154
        $region38: #{conv_apply.1} parent=35 // pred_check_branch
          %892 = sbr.rel (%p890) target = $region40
        $region39: #{conv_apply.1} parent=35 // pred_region
          %s893 = smul.u32 32, %s23
          %s895 = ssub.s32 4096, 4096
          %896 = vsyncadd %s886, %s895
          %s897 = sadd.s32 %s22, %s893
          %s898 = smul.addr %s897, 128
          %s899 = scalar_lea.hbm %s4, %s898
          %s900 = sshll.u32 %s889, 4
          %s901 = int_to_ptr.vmem [resolvable:$true] %s900
          %906 = dma.vmem_to_hbm [thread:$0]  %s901, 4096, %s899, %s886, 128, 128, 8
        $region40: #{conv_apply.1} parent=35 // pred_fallthru
          _
      $region36: #{conv_apply.1} parent=5 // pred_fallthru
        _
      %p907 = scmp.le.s32.totalorder 2, %s13
      // Predicated region
      $region41: #{conv_apply.1} parent=5 // pred_check
        %p908 = pneg %p907
      $region42: #{conv_apply.1} parent=5 // pred_check_branch
        %910 = sbr.rel (%p908) target = $region44
      $region43: #{conv_apply.1} parent=5 // pred_region
        %s911 = ssub.s32 %s13, 2
        // Predicated region
        $region45: #{conv_apply.1} parent=43 // pred_check
          %p912 = pneg %p160
        $region46: #{conv_apply.1} parent=43 // pred_check_branch
          %914 = sbr.rel (%p912) target = $region48
        $region47: #{conv_apply.1} parent=43 // pred_region
          %s915 = sand.u32 %s145, 1
          %s916 = scalar_lea.sflag [#allocation3], %s915
          %s917 = sand.u32 %s145, 1
          %s918 = smul.addr %s917, 256
          %s919 = scalar_lea.vmem [#allocation2], %s918
          %920 = dma.done %s916, 4096
        $region48: #{conv_apply.1} parent=43 // pred_fallthru
          _
      $region44: #{conv_apply.1} parent=5 // pred_fallthru
        _
    $region6: #{conv_apply.1} parent=1 // loop_footer
      %s17 = sadd.s32 1, %s13
    $region7: #{conv_apply.1} parent=1 // loop_footer_branch
      %12 = sbr.rel target = $region3
    $region8: #{conv_apply.1} parent=1 // loop_exit
      _
    %921 = vsyncpa [#allocation3], 1
    %s922 = scalar_lea.sflag [#allocation3], 1
    %923 = vsyncpa %s922, 1

</llo_original>
